<compile_context>
chip_gen: v7x
topology: tpu7x:2x2x1
jax: 0.10.0
libtpu: 0.0.40
codegen_flags: <defaults>
</compile_context>

<pallas_src>
import jax
import jax.numpy as jnp
from jax.experimental import pallas as pl
from jax.experimental.pallas import tpu as pltpu


def _round_up(n: int, m: int) -> int:
    return ((n + m - 1) // m) * m


def _pooler_kernel(x_ref, w_ref, b_ref, o_ref):
    # MXU matmul with f32 accumulation.  The astype is a no-op when the
    # activation stream already arrives in the matmul dtype (bf16 models).
    x = x_ref[...].astype(w_ref.dtype)
    y = jnp.dot(x, w_ref[...], preferred_element_type=jnp.float32)
    # Bias add (VPU) + tanh (EUP) in f32, then cast to the output dtype.
    y = y + b_ref[...].astype(jnp.float32)
    o_ref[...] = jnp.tanh(y).astype(o_ref.dtype)


def layoutlm_pooler(hidden_states, w, b, *, tm=None, matmul_dtype=None,
                    out_dtype=None):
    """LayoutLM pooler: tanh(hidden_states[:, 0] @ w + b).

    Args:
      hidden_states: [B, S, H].
      w: [H, H] dense weight stored [in, out] — the TRANSPOSE of PyTorch's
         nn.Linear.weight ([out, in]).  Pass `torch_weight.T` when porting.
      b: [H] dense bias.
      tm: max row tile (multiple of 8).  Default: 512 for <=16-bit matmul
          streams, 256 for f32 (keeps the tile inside v5e's default scoped VMEM).
      matmul_dtype: MXU dtype.  Default: hidden_states.dtype (f32 input ->
          PyTorch parity; bf16 model -> bf16, no converts).  Pass jnp.bfloat16
          explicitly to force the fast path on f32 inputs (looser numerics).
      out_dtype: output dtype.  Default: hidden_states.dtype.

    Returns: [B, H] pooled output.
    """
    B, S, H = hidden_states.shape
    assert w.shape == (H, H), "w must be [H, H] stored [in, out] (PyTorch weight.T)"
    assert b.shape == (H,)

    if matmul_dtype is None:
        matmul_dtype = hidden_states.dtype
    matmul_dtype = jnp.dtype(matmul_dtype)
    if out_dtype is None:
        out_dtype = hidden_states.dtype

    if tm is None:
        tm = 512 if matmul_dtype.itemsize <= 2 else 256
    tm = max(8, _round_up(tm, 8))

    # Balanced row tiling: pick the tile count from the max tile size, then
    # split the rows evenly (rounded to 8 sublanes) so ragged batches waste
    # fewer than 8 rows per tile instead of up to tm-1.
    n_tiles = -(-B // tm)  # cdiv
    tm_eff = min(tm, max(8, _round_up(-(-B // n_tiles), 8)))
    grid = (pl.cdiv(B, tm_eff),)

    # Fused [CLS] selection: a free row-major reshape turns token 0 into the
    # first H lanes of each (S*H)-wide row, which the BlockSpec reads straight
    # from HBM with a strided DMA (one H-wide row per example).
    if S == 1 or H % 128 == 0:
        x = hidden_states.reshape(B, S * H)
    else:
        # TODO(synk): lane-dim blocks must be 128-divisible unless they span the
        # full dim; fall back to an XLA first-token slice for exotic H.
        x = hidden_states[:, 0, :]

    w_c = w.astype(matmul_dtype)                # resident VMEM weight (constant index_map)
    b2 = b.reshape(1, H).astype(jnp.float32)    # broadcast bias row

    rows = grid[0] * tm_eff
    x_item = jnp.dtype(x.dtype).itemsize
    o_item = jnp.dtype(out_dtype).itemsize
    cost = pl.CostEstimate(
        flops=2 * rows * H * H,
        transcendentals=rows * H,               # tanh
        bytes_accessed=(B * H * x_item) + (H * H * matmul_dtype.itemsize)
                       + (H * 4) + (B * H * o_item),
    )

    # Only shard the row axis across TensorCores (v7x megacore) when there is
    # enough parallel work; otherwise the second core just re-DMAs the resident
    # weight for no compute win.
    semantics = ("parallel",) if grid[0] >= 4 else ("arbitrary",)

    out = pl.pallas_call(
        _pooler_kernel,
        out_shape=jax.ShapeDtypeStruct((B, H), out_dtype),
        grid_spec=pltpu.PrefetchScalarGridSpec(
            num_scalar_prefetch=0,
            grid=grid,
            in_specs=[
                pl.BlockSpec((tm_eff, H), lambda i: (i, 0)),   # first-token rows
                pl.BlockSpec((H, H), lambda i: (0, 0)),        # dense weight (resident)
                pl.BlockSpec((1, H), lambda i: (0, 0)),        # dense bias (resident)
            ],
            out_specs=pl.BlockSpec((tm_eff, H), lambda i: (i, 0)),
        ),
        compiler_params=pltpu.CompilerParams(dimension_semantics=semantics),
        cost_estimate=cost,
    )(x, w_c, b2)
    return out


def _reference(hidden_states, w, b):
    x0 = hidden_states[:, 0, :].astype(jnp.float32)
    y = jnp.dot(x0, w.astype(jnp.float32), precision=jax.lax.Precision.HIGHEST)
    return jnp.tanh(y + b.astype(jnp.float32))


if __name__ == "__main__":
    # Small, TPU-aligned config: batch=2, seq=8, hidden=128.
    B, S, H = 2, 8, 128

    key = jax.random.PRNGKey(0)
    k_x, k_w, k_b, k_x2 = jax.random.split(key, 4)

    hidden_states = jax.random.normal(k_x, (B, S, H), dtype=jnp.float32)
    # dense.weight stored [in, out] (transpose of PyTorch's [out, in]); dense.bias [H].
    w = jax.random.normal(k_w, (H, H), dtype=jnp.float32) * 0.02
    b = jax.random.normal(k_b, (H,), dtype=jnp.float32) * 0.02

    ref = _reference(hidden_states, w, b)

    # Default path on f32 input: f32 matmul -> PyTorch parity.
    out_f32 = jax.block_until_ready(layoutlm_pooler(hidden_states, w, b))
    assert out_f32.shape == (B, H) and out_f32.dtype == jnp.float32
    assert jnp.allclose(out_f32, ref, atol=1e-4, rtol=1e-4), "f32 path mismatch"

    # Forced bf16 matmul on f32 input (perf path): looser tolerance.
    out_bf16mm = jax.block_until_ready(
        layoutlm_pooler(hidden_states, w, b, matmul_dtype=jnp.bfloat16))
    assert out_bf16mm.shape == (B, H)
    assert jnp.allclose(out_bf16mm, ref, atol=2e-2, rtol=2e-2), "bf16 matmul mismatch"

    # bf16 end-to-end with a ragged multi-tile batch (exercises masked edge,
    # multi-step grid, and the bf16 in/out streams).
    B2 = 20
    hs2 = jax.random.normal(k_x2, (B2, S, H), dtype=jnp.float32)
    ref2 = _reference(hs2, w, b)
    out2 = jax.block_until_ready(
        layoutlm_pooler(hs2.astype(jnp.bfloat16), w, b, tm=16))
    assert out2.shape == (B2, H) and out2.dtype == jnp.bfloat16
    assert jnp.allclose(out2.astype(jnp.float32), ref2, atol=3e-2, rtol=3e-2), \
        "bf16 ragged path mismatch"

    print("KERNEL_OK")
</pallas_src>

<mosaic_0001>
module attributes {stable_mosaic.version = 11 : i64} {
  func.func @_pooler_kernel(%arg0: i32, %arg1: memref<8x128xf32, #tpu.memory_space<vmem>>, %arg2: memref<128x128xf32, #tpu.memory_space<vmem>>, %arg3: memref<1x128xf32, #tpu.memory_space<vmem>>, %arg4: memref<8x128xf32, #tpu.memory_space<vmem>>) attributes {dimension_semantics = [#tpu.dimension_semantics<arbitrary>], iteration_bounds = array<i64: 1>, scalar_prefetch = 0 : i64, scratch_operands = 0 : i64, tpu.core_type = #tpu.core_type<tc>, window_params = [{transform_indices = @transform_0, window_bounds = array<i64: 8, 128>}, {pipeline_mode = #tpu.pipeline_mode<synchronous>, transform_indices = @transform_1, window_bounds = array<i64: 128, 128>}, {pipeline_mode = #tpu.pipeline_mode<synchronous>, transform_indices = @transform_2, window_bounds = array<i64: 1, 128>}, {transform_indices = @transform_3, window_bounds = array<i64: 8, 128>}]} {
    %c0 = arith.constant 0 : index
    %c0_0 = arith.constant 0 : index
    %0 = vector.load %arg1[%c0, %c0_0] : memref<8x128xf32, #tpu.memory_space<vmem>>, vector<8x128xf32>
    %c0_1 = arith.constant 0 : index
    %c0_2 = arith.constant 0 : index
    %1 = vector.load %arg2[%c0_1, %c0_2] : memref<128x128xf32, #tpu.memory_space<vmem>>, vector<128x128xf32>
    %cst = arith.constant dense<0.000000e+00> : vector<8x128xf32>
    %2 = tpu.matmul %0, %1, %cst {dimension_numbers = #tpu.dot_dimension_numbers<[1], [0], [0], [1], [0, 0, 1, 1], [], []>} : vector<8x128xf32>, vector<128x128xf32>, vector<8x128xf32> -> vector<8x128xf32>
    %c0_3 = arith.constant 0 : index
    %c0_4 = arith.constant 0 : index
    %3 = vector.load %arg3[%c0_3, %c0_4] : memref<1x128xf32, #tpu.memory_space<vmem>>, vector<1x128xf32>
    %4 = vector.broadcast %3 : vector<1x128xf32> to vector<8x128xf32>
    %5 = arith.addf %2, %4 : vector<8x128xf32>
    %6 = math.tanh %5 : vector<8x128xf32>
    %c0_5 = arith.constant 0 : index
    %c0_6 = arith.constant 0 : index
    %7 = vector.load %arg4[%c0_5, %c0_6] : memref<8x128xf32, #tpu.memory_space<vmem>>, vector<8x128xf32>
    tpu.vector_store %arg4[%c0_5, %c0_6], %6 {strides = array<i32>} : memref<8x128xf32, #tpu.memory_space<vmem>>, vector<8x128xf32>,
    return
  }
  func.func @transform_0(%arg0: i32) -> (i32, i32) {
    %c0_i32 = arith.constant 0 : i32
    %c0_i32_0 = arith.constant 0 : i32
    return %arg0, %c0_i32 : i32, i32
  }
  func.func @transform_1(%arg0: i32) -> (i32, i32) {
    %c0_i32 = arith.constant 0 : i32
    %c0_i32_0 = arith.constant 0 : i32
    %c0_i32_1 = arith.constant 0 : i32
    return %c0_i32, %c0_i32_0 : i32, i32
  }
  func.func @transform_2(%arg0: i32) -> (i32, i32) {
    %c0_i32 = arith.constant 0 : i32
    %c0_i32_0 = arith.constant 0 : i32
    %c0_i32_1 = arith.constant 0 : i32
    return %c0_i32, %c0_i32_0 : i32, i32
  }
  func.func @transform_3(%arg0: i32) -> (i32, i32) {
    %c0_i32 = arith.constant 0 : i32
    %c0_i32_0 = arith.constant 0 : i32
    return %arg0, %c0_i32 : i32, i32
  }
}

</mosaic_0001>

<llo_original>
// kernel: tpu_custom_call.1
$region0: #{tpu_custom_call.1}
  #allocation0 [shape = 'u32[]', space=smem, size = 0x4, offset = 0x4, fixed_abs, tag = 'smem constant byte address 0x4 - core index']
  #allocation1 [shape = 'u32[144,128]{1,0:T(1,128)}', space=vmem, size = 0x12000, scoped, tag = 'internal scratch']
  %s0 = inlined_call_operand.hbm [shape: f32[2,1024], index: 0, kind: input, shape index: {}]
  %s1 = inlined_call_operand.hbm [shape: f32[128,128], index: 1, kind: input, shape index: {}]
  %s2 = inlined_call_operand.vmem [shape: f32[1,128], index: 2, kind: input, shape index: {}]
  %s3 = inlined_call_operand.hbm [shape: f32[2,128], index: 3, kind: output, shape index: {}]
  %s4 = sld [smem:[#allocation0]]
  $region30: #{tpu_custom_call.1} parent=0
    _
  %s6 = ssub.s32 1, %s4
  %s7 = scalar_select 0, %s6, %s4
  $region1: #{tpu_custom_call.1} parent=0
    #allocation2 [shape = 'u8[4096]{0}', space=vmem, size = 0x1000, scoped, tag = 'input window, operand 0, single buffered']
    #allocation3 [shape = 's32[1]{0}', space=sflag, size = 0x4, scoped, tag = 'scoped memory for tpu_custom_call.1']
    #allocation4 [shape = 's32[1]{0}', space=sflag, size = 0x4, scoped, tag = 'scoped memory for tpu_custom_call.1']
    #allocation5 [shape = 'u8[65536]{0}', space=vmem, size = 0x10000, scoped, tag = 'input window, operand 1, single buffered']
    #allocation6 [shape = 's32[1]{0}', space=sflag, size = 0x4, scoped, tag = 'scoped memory for tpu_custom_call.1']
    #allocation7 [shape = 'u8[4096]{0}', space=vmem, size = 0x1000, scoped, tag = 'output window, operand 0, single buffered']
    %8 = vsyncpa [#allocation3], 0
    %9 = vsyncpa [#allocation6], 0
    %10 = vsyncpa [#allocation4], 0
    // Predicated region
    $region2: #{tpu_custom_call.1} parent=1 // pred_check
      _
    $region3: #{tpu_custom_call.1} parent=1 // pred_check_branch
      %12 = sbr.rel (0) target = $region5
    $region4: #{tpu_custom_call.1} parent=1 // pred_region
      %s14 = ssub.s32 128, 32
      %15 = vsyncadd [#allocation3], %s14
      %s16 = sshll.u32 [#allocation2], 4
      %s17 = int_to_ptr.vmem [resolvable:$true] %s16
      %22 = dma.hbm_to_vmem [thread:$0]  %s0, 32, %s17, [#allocation3], 256, 32, 2
    $region5: #{tpu_custom_call.1} parent=1 // pred_fallthru
      _
    // Predicated region
    $region6: #{tpu_custom_call.1} parent=1 // pred_check
      _
    $region7: #{tpu_custom_call.1} parent=1 // pred_check_branch
      %24 = sbr.rel (0) target = $region9
    $region8: #{tpu_custom_call.1} parent=1 // pred_region
      %s26 = ssub.s32 2048, 2048
      %27 = vsyncadd [#allocation6], %s26
      %s28 = sshll.u32 [#allocation5], 4
      %s29 = int_to_ptr.vmem [resolvable:$true] %s28
      %34 = dma.hbm_to_vmem [thread:$0]  %s1, 2048, %s29, [#allocation6], 128, 128, 8
    $region9: #{tpu_custom_call.1} parent=1 // pred_fallthru
      _
    // Predicated region
    $region10: #{tpu_custom_call.1} parent=1 // pred_check
      _
    $region11: #{tpu_custom_call.1} parent=1 // pred_check_branch
      %36 = sbr.rel (0) target = $region13
    $region12: #{tpu_custom_call.1} parent=1 // pred_region
      _
    $region13: #{tpu_custom_call.1} parent=1 // pred_fallthru
      _
    // Predicated region
    $region14: #{tpu_custom_call.1} parent=1 // pred_check
      _
    $region15: #{tpu_custom_call.1} parent=1 // pred_check_branch
      %38 = sbr.rel (0) target = $region17
    $region16: #{tpu_custom_call.1} parent=1 // pred_region
      %39 = dma.done [#allocation3], 128
    $region17: #{tpu_custom_call.1} parent=1 // pred_fallthru
      _
    // Predicated region
    $region18: #{tpu_custom_call.1} parent=1 // pred_check
      _
    $region19: #{tpu_custom_call.1} parent=1 // pred_check_branch
      %41 = sbr.rel (0) target = $region21
    $region20: #{tpu_custom_call.1} parent=1 // pred_region
      %42 = dma.done [#allocation6], 2048
    $region21: #{tpu_custom_call.1} parent=1 // pred_fallthru
      _
    %v43 = vld [vmem:[#allocation2] sm:$0xff]
    %v44 = vld [vmem:[#allocation5] sm:$0xff]
    %v45 = vld [vmem:[#allocation5 + $0x8] sm:$0xff]
    %v46 = vld [vmem:[#allocation5 + $0x10] sm:$0xff]
    %v47 = vld [vmem:[#allocation5 + $0x18] sm:$0xff]
    %v48 = vld [vmem:[#allocation5 + $0x20] sm:$0xff]
    %v49 = vld [vmem:[#allocation5 + $0x28] sm:$0xff]
    %v50 = vld [vmem:[#allocation5 + $0x30] sm:$0xff]
    %v51 = vld [vmem:[#allocation5 + $0x38] sm:$0xff]
    %v52 = vld [vmem:[#allocation5 + $0x40] sm:$0xff]
    %v53 = vld [vmem:[#allocation5 + $0x48] sm:$0xff]
    %v54 = vld [vmem:[#allocation5 + $0x50] sm:$0xff]
    %v55 = vld [vmem:[#allocation5 + $0x58] sm:$0xff]
    %v56 = vld [vmem:[#allocation5 + $0x60] sm:$0xff]
    %v57 = vld [vmem:[#allocation5 + $0x68] sm:$0xff]
    %v58 = vld [vmem:[#allocation5 + $0x70] sm:$0xff]
    %v59 = vld [vmem:[#allocation5 + $0x78] sm:$0xff]
    %v60 = vld [vmem:[%s2] sm:$0x1]
    %v62 = vlaneseq
    %v63 = vshrl.u32 %v62, 7
    %v64 = vsub.s32 0, %v63
    %v65 = vrot.slane %v60, %v64
    %67 = vmatprep.subr.mxu0 0.0
    %68 = vmatpush1.msra.mxu0 %v44
    %69 = vmatprep.subr.mxu0 0.0
    %70 = vmatpush1.msra.mxu0 %v45
    %71 = vmatprep.subr.mxu0 0.0
    %72 = vmatpush1.msra.mxu0 %v46
    %73 = vmatprep.subr.mxu0 0.0
    %74 = vmatpush1.msra.mxu0 %v47
    %75 = vmatprep.subr.mxu0 0.0
    %76 = vmatpush1.msra.mxu0 %v48
    %77 = vmatprep.subr.mxu0 0.0
    %78 = vmatpush1.msra.mxu0 %v49
    %79 = vmatprep.subr.mxu0 0.0
    %80 = vmatpush1.msra.mxu0 %v50
    %81 = vmatprep.subr.mxu0 0.0
    %82 = vmatpush1.msra.mxu0 %v51
    %83 = vmatprep.subr.mxu0 0.0
    %84 = vmatpush1.msra.mxu0 %v52
    %85 = vmatprep.subr.mxu0 0.0
    %86 = vmatpush1.msra.mxu0 %v53
    %87 = vmatprep.subr.mxu0 0.0
    %88 = vmatpush1.msra.mxu0 %v54
    %89 = vmatprep.subr.mxu0 0.0
    %90 = vmatpush1.msra.mxu0 %v55
    %91 = vmatprep.subr.mxu0 0.0
    %92 = vmatpush1.msra.mxu0 %v56
    %93 = vmatprep.subr.mxu0 0.0
    %94 = vmatpush1.msra.mxu0 %v57
    %95 = vmatprep.subr.mxu0 0.0
    %96 = vmatpush1.msra.mxu0 %v58
    %97 = vmatprep.subr.mxu0 0.0
    %98 = vmatpush1.msra.mxu0 %v59
    %99 = vmatprep.subr.mxu0 0.0
    %100 = vmatpush1.msra.mxu0 0.0
    %101 = vmatprep.subr.mxu0 0.0
    %102 = vmatpush1.msra.mxu0 0.0
    %103 = vmatprep.subr.mxu0 0.0
    %104 = vmatpush1.msra.mxu0 0.0
    %105 = vmatprep.subr.mxu0 0.0
    %106 = vmatpush1.msra.mxu0 0.0
    %107 = vmatprep.subr.mxu0 0.0
    %108 = vmatpush1.msra.mxu0 0.0
    %109 = vmatprep.subr.mxu0 0.0
    %110 = vmatpush1.msra.mxu0 0.0
    %111 = vmatprep.subr.mxu0 0.0
    %112 = vmatpush1.msra.mxu0 0.0
    %113 = vmatprep.subr.mxu0 0.0
    %114 = vmatpush1.msra.mxu0 0.0
    %115 = vmatprep.subr.mxu0 0.0
    %116 = vmatpush1.msra.mxu0 0.0
    %117 = vmatprep.subr.mxu0 0.0
    %118 = vmatpush1.msra.mxu0 0.0
    %119 = vmatprep.subr.mxu0 0.0
    %120 = vmatpush1.msra.mxu0 0.0
    %121 = vmatprep.subr.mxu0 0.0
    %122 = vmatpush1.msra.mxu0 0.0
    %123 = vmatprep.subr.mxu0 0.0
    %124 = vmatpush1.msra.mxu0 0.0
    %125 = vmatprep.subr.mxu0 0.0
    %126 = vmatpush1.msra.mxu0 0.0
    %127 = vmatprep.subr.mxu0 0.0
    %128 = vmatpush1.msra.mxu0 0.0
    %129 = vmatprep.subr.mxu0 0.0
    %130 = vmatpush1.msra.mxu0 0.0
    %131 = vmatprep.mubr.f32.mxu0 0.0
    %132 = vmatmul.mubr.f32.gmra.mrb[0].mxu0 %v43
    %v133 = vpop.f32.mrb[0].mxu0
    %v134 = vadd.f32 %v65, %v133
    %v135 = vpop.f32.mrb[0].mxu0
    %136 = vdwg.mxu0
    %v137 = vtanh.pop %v134
    %138 = vst [vmem:[#allocation7] sm:$0xff] %v137
    // Predicated region
    $region22: #{tpu_custom_call.1} parent=1 // pred_check
      _
    $region23: #{tpu_custom_call.1} parent=1 // pred_check_branch
      %140 = sbr.rel (0) target = $region25
    $region24: #{tpu_custom_call.1} parent=1 // pred_region
      %s142 = ssub.s32 128, 32
      %143 = vsyncadd [#allocation4], %s142
      %s144 = sshll.u32 [#allocation7], 4
      %s145 = int_to_ptr.vmem [resolvable:$true] %s144
      %150 = dma.vmem_to_hbm [thread:$0]  %s145, 32, %s3, [#allocation4], 32, 32, 2
    $region25: #{tpu_custom_call.1} parent=1 // pred_fallthru
      _
    // Predicated region
    $region26: #{tpu_custom_call.1} parent=1 // pred_check
      _
    $region27: #{tpu_custom_call.1} parent=1 // pred_check_branch
      %152 = sbr.rel (0) target = $region29
    $region28: #{tpu_custom_call.1} parent=1 // pred_region
      %153 = dma.done [#allocation4], 128
    $region29: #{tpu_custom_call.1} parent=1 // pred_fallthru
      _
    %154 = vsyncpa [#allocation3], 1
    %155 = vsyncpa [#allocation6], 1
    %156 = vsyncpa [#allocation4], 1

</llo_original>
